<compile_context>
chip_gen: v6e
topology: v6e:2x2x1
jax: 0.10.0
libtpu: 0.0.40
codegen_flags: <defaults>
</compile_context>

<pallas_src>
import jax
import jax.numpy as jnp
from jax import lax
from jax.experimental import pallas as pl
from jax.experimental.pallas import tpu as pltpu


def _round_up(x, m):
    return ((x + m - 1) // m) * m


def _cdiv(a, b):
    return (a + b - 1) // b


# ---------------------------------------------------------------------------
# Pallas kernel: logits_pad = onehot(idx) @ logits_tab   (MXU gather + store)
# ---------------------------------------------------------------------------
def mlp_kernel(idx_ref, tab_ref, out_ref):
    tile_m = idx_ref.shape[0]
    vtab = tab_ref.shape[0]

    idx = idx_ref[...]                                            # (tile_m, 1) i32
    cols = lax.broadcasted_iota(jnp.int32, (tile_m, vtab), 1)     # (tile_m, Vtab)
    onehot = (idx == cols).astype(jnp.float32)                    # exact 0/1 f32

    # Exact f32 row gather via one-hot matmul on the MXU (single-term sums).
    out_ref[...] = jnp.dot(
        onehot, tab_ref[...], preferred_element_type=jnp.float32
    ).astype(out_ref.dtype)


def _choose_tile_m(M, *, target=2048, min_tile=128):
    """Pick (tile_m, padded_M): bounded row padding, >=2 grid steps for large M."""
    m8 = _round_up(max(M, 1), 8)
    if m8 <= 2 * min_tile:
        return m8, m8                                   # one small tile, <=7 pad rows
    n_tiles = max(2, _cdiv(m8, target))                 # >=2 steps -> both v7x TCs engage
    tile_m = _round_up(_cdiv(m8, n_tiles), 8)
    mp = _round_up(m8, tile_m)
    return tile_m, mp


def mlp_pallas(idx_flat, tab, *, out_dtype=jnp.float32):
    """idx_flat: (M,) int32 in [0, V]; tab: (Vtab, Vpad) f32 precomputed logits LUT.
    Returns padded logits (Mpad, Vpad); caller slices [:M, :V] in one pass.
    (out_dtype=jnp.bfloat16 halves HBM writeback if the consumer tolerates it.)"""
    M = idx_flat.shape[0]
    vtab, vpad = tab.shape
    tile_m, mp = _choose_tile_m(M)

    idx2d = idx_flat.reshape(M, 1).astype(jnp.int32)
    if mp != M:
        idx2d = jnp.pad(idx2d, ((0, mp - M), (0, 0)))   # padded rows use idx 0, sliced off

    return pl.pallas_call(
        mlp_kernel,
        out_shape=jax.ShapeDtypeStruct((mp, vpad), out_dtype),
        grid=(mp // tile_m,),
        in_specs=[
            pl.BlockSpec((tile_m, 1), lambda i: (i, 0)),     # idx rows stream
            pl.BlockSpec((vtab, vpad), lambda i: (0, 0)),    # logits LUT resident in VMEM
        ],
        out_specs=pl.BlockSpec((tile_m, vpad), lambda i: (i, 0)),  # lane-dense stores
        compiler_params=pltpu.CompilerParams(
            dimension_semantics=("parallel",)                # rows independent -> 2 TCs on v7x
        ),
    )(idx2d, tab)


# ---------------------------------------------------------------------------
# One-time parameter preparation: fold the entire MLP into a (V+1, Vpad) table
# ---------------------------------------------------------------------------
def prepare_mlp_params(params, *, block_size, vocab_size):
    emb = params["emb"].astype(jnp.float32)            # (V+1, n_embd)
    w1 = params["w1"].astype(jnp.float32)              # (H, block_size*n_embd)
    b1 = params["b1"].astype(jnp.float32)              # (H,)
    w2 = params["w2"].astype(jnp.float32)              # (V, H)
    b2 = params["b2"].astype(jnp.float32)              # (V,)

    n_embd = emb.shape[1]
    V = w2.shape[0]
    hi = lax.Precision.HIGHEST                          # exact-f32 one-time precompute

    w1_t = w1.T                                         # (block_size*n_embd, H)
    blank_row = emb[vocab_size]                         # (n_embd,) BLANK embedding
    blank_tail = jnp.tile(blank_row, block_size - 1)    # constant tail of concat
    b1_eff = b1 + jnp.dot(blank_tail, w1_t[n_embd:, :], precision=hi)

    h_tab = jnp.tanh(jnp.dot(emb, w1_t[:n_embd, :], precision=hi) + b1_eff)   # (V+1, H)
    logits_tab = jnp.dot(h_tab, w2.T, precision=hi) + b2                       # (V+1, V)

    vpad = _round_up(V, 128)                            # lane-dense output stores
    vtab = _round_up(V + 1, 8)                          # sublane-aligned table rows
    tab = jnp.zeros((vtab, vpad), jnp.float32).at[: V + 1, :V].set(logits_tab)
    return {"tab": tab, "vocab_size": V}


# ---------------------------------------------------------------------------
# Full forward (single fused pallas_call; one combined slice outside)
# ---------------------------------------------------------------------------
def mlp_forward(idx, prep):
    B, T = idx.shape
    V = prep["vocab_size"]
    idx_flat = idx.reshape(-1).astype(jnp.int32)
    out_pad = mlp_pallas(idx_flat, prep["tab"])
    # Single combined row+lane slice, then reshape (no double HBM pass).
    logits = lax.slice(out_pad, (0, 0), (B * T, V)).reshape(B, T, V)
    # TODO(synk): targets branch (cross-entropy, ignore_index=-1) not implemented;
    # it should be fused into the kernel so padded logits never hit HBM.
    return logits, None


# ---------------------------------------------------------------------------
# Deterministic parameter init (PyTorch-style layouts) + demo
# ---------------------------------------------------------------------------
def init_params(key, *, vocab_size, n_embd, n_embd2, block_size):
    k_emb, k_w1, k_b1, k_w2, k_b2 = jax.random.split(key, 5)
    d1 = block_size * n_embd
    emb = jax.random.normal(k_emb, (vocab_size + 1, n_embd), jnp.float32)
    w1 = jax.random.uniform(k_w1, (n_embd2, d1), jnp.float32,
                            -1.0 / jnp.sqrt(d1), 1.0 / jnp.sqrt(d1))
    b1 = jax.random.uniform(k_b1, (n_embd2,), jnp.float32,
                            -1.0 / jnp.sqrt(d1), 1.0 / jnp.sqrt(d1))
    w2 = jax.random.uniform(k_w2, (vocab_size, n_embd2), jnp.float32,
                            -1.0 / jnp.sqrt(n_embd2), 1.0 / jnp.sqrt(n_embd2))
    b2 = jax.random.uniform(k_b2, (vocab_size,), jnp.float32,
                            -1.0 / jnp.sqrt(n_embd2), 1.0 / jnp.sqrt(n_embd2))
    return {"emb": emb, "w1": w1, "b1": b1, "w2": w2, "b2": b2}


if __name__ == "__main__":
    block_size = 8
    vocab_size = 27
    n_embd = 16
    n_embd2 = 32
    B, T = 2, block_size

    key = jax.random.PRNGKey(0)
    k_params, k_idx = jax.random.split(key)
    params = init_params(k_params, vocab_size=vocab_size, n_embd=n_embd,
                         n_embd2=n_embd2, block_size=block_size)
    idx = jax.random.randint(k_idx, (B, T), 0, vocab_size, dtype=jnp.int32)

    prep = prepare_mlp_params(params, block_size=block_size, vocab_size=vocab_size)
    logits, loss = mlp_forward(idx, prep)
    logits = jax.block_until_ready(logits)
    assert logits.shape == (B, T, vocab_size)
    assert loss is None

    # Reference: pure-JAX module semantics in f32 (HIGHEST-precision matmuls).
    hi = lax.Precision.HIGHEST
    emb0 = params["emb"][idx]
    blank = jnp.broadcast_to(params["emb"][vocab_size], (B, T, n_embd))
    x_ref = jnp.concatenate([emb0] + [blank] * (block_size - 1), axis=-1)
    h_ref = jnp.tanh(
        jnp.einsum("btd,hd->bth", x_ref, params["w1"], precision=hi) + params["b1"])
    logits_ref = (
        jnp.einsum("bth,vh->btv", h_ref, params["w2"], precision=hi) + params["b2"])
    max_err = float(jnp.max(jnp.abs(logits - logits_ref)))
    assert jnp.allclose(logits, logits_ref, rtol=1e-4, atol=1e-4), max_err

    print("KERNEL_OK")
</pallas_src>

<mosaic_0001>
module attributes {stable_mosaic.version = 11 : i64} {
  func.func @mlp_kernel(%arg0: i32, %arg1: memref<16x1xi32, #tpu.memory_space<vmem>>, %arg2: memref<32x128xf32, #tpu.memory_space<vmem>>, %arg3: memref<16x128xf32, #tpu.memory_space<vmem>>) attributes {dimension_semantics = [#tpu.dimension_semantics<parallel>], iteration_bounds = array<i64: 1>, scalar_prefetch = 0 : i64, scratch_operands = 0 : i64, tpu.core_type = #tpu.core_type<tc>, window_params = [{transform_indices = @transform_0, window_bounds = array<i64: 16, 1>}, {pipeline_mode = #tpu.pipeline_mode<synchronous>, transform_indices = @transform_1, window_bounds = array<i64: 32, 128>}, {transform_indices = @transform_2, window_bounds = array<i64: 16, 128>}]} {
    %c0 = arith.constant 0 : index
    %c0_0 = arith.constant 0 : index
    %0 = vector.load %arg1[%c0, %c0_0] : memref<16x1xi32, #tpu.memory_space<vmem>>, vector<16x1xi32>
    %1 = tpu.iota {dimensions = array<i32: 1>} : vector<16x32xi32>
    %2 = vector.broadcast %0 : vector<16x1xi32> to vector<16x32xi32>
    %3 = arith.cmpi eq, %2, %1 : vector<16x32xi32>
    %4 = arith.extui %3 : vector<16x32xi1> to vector<16x32xi32>
    %5 = arith.sitofp %4 : vector<16x32xi32> to vector<16x32xf32>
    %c0_1 = arith.constant 0 : index
    %c0_2 = arith.constant 0 : index
    %6 = vector.load %arg2[%c0_1, %c0_2] : memref<32x128xf32, #tpu.memory_space<vmem>>, vector<32x128xf32>
    %cst = arith.constant dense<0.000000e+00> : vector<16x128xf32>
    %7 = tpu.matmul %5, %6, %cst {dimension_numbers = #tpu.dot_dimension_numbers<[1], [0], [0], [1], [0, 0, 1, 1], [], []>} : vector<16x32xf32>, vector<32x128xf32>, vector<16x128xf32> -> vector<16x128xf32>
    %c0_3 = arith.constant 0 : index
    %c0_4 = arith.constant 0 : index
    %8 = vector.load %arg3[%c0_3, %c0_4] : memref<16x128xf32, #tpu.memory_space<vmem>>, vector<16x128xf32>
    tpu.vector_store %arg3[%c0_3, %c0_4], %7 {strides = array<i32>} : memref<16x128xf32, #tpu.memory_space<vmem>>, vector<16x128xf32>,
    return
  }
  func.func @transform_0(%arg0: i32) -> (i32, i32) {
    %c0_i32 = arith.constant 0 : i32
    %c0_i32_0 = arith.constant 0 : i32
    return %arg0, %c0_i32 : i32, i32
  }
  func.func @transform_1(%arg0: i32) -> (i32, i32) {
    %c0_i32 = arith.constant 0 : i32
    %c0_i32_0 = arith.constant 0 : i32
    %c0_i32_1 = arith.constant 0 : i32
    return %c0_i32, %c0_i32_0 : i32, i32
  }
  func.func @transform_2(%arg0: i32) -> (i32, i32) {
    %c0_i32 = arith.constant 0 : i32
    %c0_i32_0 = arith.constant 0 : i32
    return %arg0, %c0_i32 : i32, i32
  }
}

</mosaic_0001>

<llo_original>
// kernel: tpu_custom_call.1
$region0: #{tpu_custom_call.1}
  #allocation0 [shape = 'u32[]', space=smem, size = 0x4, offset = 0x4, fixed_abs, tag = 'smem constant byte address 0x4 - core index']
  #allocation1 [shape = 'u32[144,128]{1,0:T(1,128)}', space=vmem, size = 0x12000, scoped, tag = 'internal scratch']
  %s0 = inlined_call_operand.vmem [shape: s32[16,1], index: 0, kind: input, shape index: {}]
  %s1 = inlined_call_operand.hbm [shape: f32[32,128], index: 1, kind: input, shape index: {}]
  %s2 = inlined_call_operand.hbm [shape: f32[16,128], index: 2, kind: output, shape index: {}]
  %s3 = sld [smem:[#allocation0]]
  $region22: #{tpu_custom_call.1} parent=0
    _
  %s5 = ssub.s32 1, %s3
  %s6 = scalar_select 0, %s5, %s3
  $region1: #{tpu_custom_call.1} parent=0
    #allocation2 [shape = 'u8[16384]{0}', space=vmem, size = 0x4000, scoped, tag = 'input window, operand 1, single buffered']
    #allocation3 [shape = 's32[1]{0}', space=sflag, size = 0x4, scoped, tag = 'scoped memory for tpu_custom_call.1']
    #allocation4 [shape = 's32[1]{0}', space=sflag, size = 0x4, scoped, tag = 'scoped memory for tpu_custom_call.1']
    #allocation5 [shape = 'u8[8192]{0}', space=vmem, size = 0x2000, scoped, tag = 'output window, operand 0, single buffered']
    %7 = vsyncpa [#allocation3], 0
    %8 = vsyncpa [#allocation4], 0
    // Predicated region
    $region2: #{tpu_custom_call.1} parent=1 // pred_check
      _
    $region3: #{tpu_custom_call.1} parent=1 // pred_check_branch
      %10 = sbr.rel (0) target = $region5
    $region4: #{tpu_custom_call.1} parent=1 // pred_region
      _
    $region5: #{tpu_custom_call.1} parent=1 // pred_fallthru
      _
    // Predicated region
    $region6: #{tpu_custom_call.1} parent=1 // pred_check
      _
    $region7: #{tpu_custom_call.1} parent=1 // pred_check_branch
      %12 = sbr.rel (0) target = $region9
    $region8: #{tpu_custom_call.1} parent=1 // pred_region
      %s14 = ssub.s32 512, 512
      %15 = vsyncadd [#allocation3], %s14
      %s16 = sshll.u32 [#allocation2], 4
      %s17 = int_to_ptr.vmem [resolvable:$true] %s16
      %22 = dma.hbm_to_vmem [thread:$0]  %s1, 512, %s17, [#allocation3], 128, 128, 8
    $region9: #{tpu_custom_call.1} parent=1 // pred_fallthru
      _
    // Predicated region
    $region10: #{tpu_custom_call.1} parent=1 // pred_check
      _
    $region11: #{tpu_custom_call.1} parent=1 // pred_check_branch
      %24 = sbr.rel (0) target = $region13
    $region12: #{tpu_custom_call.1} parent=1 // pred_region
      %25 = dma.done [#allocation3], 512
    $region13: #{tpu_custom_call.1} parent=1 // pred_fallthru
      _
    %v26 = vld [vmem:[%s0] sm:$0xff]
    %v27 = vld [vmem:[%s0 + $0x8] sm:$0xff]
    %v28 = vlaneseq
    %v29 = vand.u32 %v28, 127
    %30 = vset.pattern.permute.xlu0 0
    %31 = vperm.xlu0 %30, %v26
    %v32 = vpop.permute.xlu0 %31
    %33 = vset.pattern.permute.xlu0 0
    %34 = vperm.xlu0 %33, %v27
    %v35 = vpop.permute.xlu0 %34
    %vm36 = vcmp.eq.s32.totalorder %v32, %v29
    %vm37 = vcmp.eq.s32.totalorder %v35, %v29
    %v38 = vsel %vm36, 1, 0
    %v39 = vsel %vm37, 1, 0
    %v40 = vcvt.s32.f32 %v38
    %v41 = vcvt.s32.f32 %v39
    %v42 = vld [vmem:[#allocation2] sm:$0xff]
    %v43 = vld [vmem:[#allocation2 + $0x8] sm:$0xff]
    %v44 = vld [vmem:[#allocation2 + $0x10] sm:$0xff]
    %v45 = vld [vmem:[#allocation2 + $0x18] sm:$0xff]
    %vm46 = vcmask 261120
    %v48 = vsel %vm46, %v40, 0
    %v51 = vsel %vm46, %v41, 0
    %53 = vmatprep.subr.mxu0 0.0
    %54 = vmatpush1.msra.mxu0 0.0
    %55 = vmatprep.subr.mxu0 0.0
    %56 = vmatpush1.msra.mxu0 0.0
    %57 = vmatprep.subr.mxu0 0.0
    %58 = vmatpush1.msra.mxu0 0.0
    %59 = vmatprep.subr.mxu0 0.0
    %60 = vmatpush1.msra.mxu0 0.0
    %61 = vmatprep.subr.mxu0 0.0
    %62 = vmatpush1.msra.mxu0 0.0
    %63 = vmatprep.subr.mxu0 0.0
    %64 = vmatpush1.msra.mxu0 0.0
    %65 = vmatprep.subr.mxu0 0.0
    %66 = vmatpush1.msra.mxu0 0.0
    %67 = vmatprep.subr.mxu0 0.0
    %68 = vmatpush1.msra.mxu0 0.0
    %69 = vmatprep.subr.mxu0 0.0
    %70 = vmatpush1.msra.mxu0 0.0
    %71 = vmatprep.subr.mxu0 0.0
    %72 = vmatpush1.msra.mxu0 0.0
    %73 = vmatprep.subr.mxu0 0.0
    %74 = vmatpush1.msra.mxu0 0.0
    %75 = vmatprep.subr.mxu0 0.0
    %76 = vmatpush1.msra.mxu0 0.0
    %77 = vmatprep.subr.mxu0 0.0
    %78 = vmatpush1.msra.mxu0 %v45
    %79 = vmatprep.subr.mxu0 0.0
    %80 = vmatpush1.msra.mxu0 %v44
    %81 = vmatprep.subr.mxu0 0.0
    %82 = vmatpush1.msra.mxu0 %v43
    %83 = vmatprep.subr.mxu0 0.0
    %84 = vmatpush1.msra.mxu0 %v42
    %85 = vmatprep.subr.mxu0 0.0
    %86 = vmatpush2.msra.mxu0 0.0
    %87 = vmatprep.subr.mxu0 0.0
    %88 = vmatpush2.msra.mxu0 0.0
    %89 = vmatprep.subr.mxu0 0.0
    %90 = vmatpush2.msra.mxu0 0.0
    %91 = vmatprep.subr.mxu0 0.0
    %92 = vmatpush2.msra.mxu0 0.0
    %93 = vmatprep.subr.mxu0 0.0
    %94 = vmatpush2.msra.mxu0 0.0
    %95 = vmatprep.subr.mxu0 0.0
    %96 = vmatpush2.msra.mxu0 0.0
    %97 = vmatprep.subr.mxu0 0.0
    %98 = vmatpush2.msra.mxu0 0.0
    %99 = vmatprep.subr.mxu0 0.0
    %100 = vmatpush2.msra.mxu0 0.0
    %101 = vmatprep.subr.mxu0 0.0
    %102 = vmatpush2.msra.mxu0 0.0
    %103 = vmatprep.subr.mxu0 0.0
    %104 = vmatpush2.msra.mxu0 0.0
    %105 = vmatprep.subr.mxu0 0.0
    %106 = vmatpush2.msra.mxu0 0.0
    %107 = vmatprep.subr.mxu0 0.0
    %108 = vmatpush2.msra.mxu0 0.0
    %109 = vmatprep.subr.mxu0 0.0
    %110 = vmatpush2.msra.mxu0 0.0
    %111 = vmatprep.subr.mxu0 0.0
    %112 = vmatpush2.msra.mxu0 0.0
    %113 = vmatprep.subr.mxu0 0.0
    %114 = vmatpush2.msra.mxu0 0.0
    %115 = vmatprep.subr.mxu0 0.0
    %116 = vmatpush2.msra.mxu0 0.0
    %117 = vmatprep.mubr.f32.mxu0 0.0
    %118 = vmatmul.mubr.f32.gmra.mxu0 %v48
    %v119 = vpop.f32.mrf.mxu0
    %v120 = vadd.f32 0.0, %v119
    %v121 = vpop.f32.mrf.mxu0
    %122 = vmatprep.mubr.f32.mxu0 0.0
    %123 = vmatmul.mubr.f32.gmra.mxu0 %v51
    %v124 = vpop.f32.mrf.mxu0
    %v125 = vadd.f32 0.0, %v124
    %v126 = vpop.f32.mrf.mxu0
    %127 = vdwg.mxu0
    %128 = vst [vmem:[#allocation5] sm:$0xff] %v120
    %129 = vst [vmem:[#allocation5 + $0x8] sm:$0xff] %v125
    // Predicated region
    $region14: #{tpu_custom_call.1} parent=1 // pred_check
      _
    $region15: #{tpu_custom_call.1} parent=1 // pred_check_branch
      %131 = sbr.rel (0) target = $region17
    $region16: #{tpu_custom_call.1} parent=1 // pred_region
      %s133 = ssub.s32 256, 256
      %134 = vsyncadd [#allocation4], %s133
      %s135 = sshll.u32 [#allocation5], 4
      %s136 = int_to_ptr.vmem [resolvable:$true] %s135
      %141 = dma.vmem_to_hbm [thread:$0]  %s136, 256, %s2, [#allocation4], 128, 128, 8
    $region17: #{tpu_custom_call.1} parent=1 // pred_fallthru
      _
    // Predicated region
    $region18: #{tpu_custom_call.1} parent=1 // pred_check
      _
    $region19: #{tpu_custom_call.1} parent=1 // pred_check_branch
      %143 = sbr.rel (0) target = $region21
    $region20: #{tpu_custom_call.1} parent=1 // pred_region
      %144 = dma.done [#allocation4], 256
    $region21: #{tpu_custom_call.1} parent=1 // pred_fallthru
      _
    %145 = vsyncpa [#allocation3], 1
    %146 = vsyncpa [#allocation4], 1

</llo_original>
